<compile_context>
chip_gen: v7x
topology: tpu7x:2x2x1
jax: 0.10.0
libtpu: 0.0.40
codegen_flags: <defaults>
</compile_context>

<pallas_src>
import functools
from collections import defaultdict

import numpy as np
import jax
import jax.numpy as jnp
from jax import lax
from jax.experimental import pallas as pl
from jax.experimental.pallas import tpu as pltpu

N_BLUR_ITERS = 32
AO_SCALE = 4.0
LIGHT_DIR = (0.7053, -0.7053, 0.7053)   # ld1 in normals_to_diffuse_render
_BLUR_UNROLL = 4                        # 32 % 4 == 0

# Path A routing: keep the resident (HW,HW) f32 operator <= 4 MiB, and only use
# it when the batch is large enough to amortize the operator DMA / fill the MXU
# M dimension (review: small-B small-image cases go to the stencil path).
_MATMUL_MAX_PIXELS = 1024
_MATMUL_MIN_BATCH = 8
_MATMUL_BATCH_TILE = 32


def _default_blur_filter():
    c = 1.0 / 4.0
    return np.array([[0.0, c, 0.0], [c, 0.0, c], [0.0, c, 0.0]], dtype=np.float32)


def _vmem_limit_bytes(working_bytes):
    """Generation-aware VMEM request: working set + headroom, never the full
    physical per-core VMEM (v7x only has 64 MiB/TC; v5e/v6e have 128 MiB)."""
    try:
        cap = int(pltpu.get_tpu_info().vmem_capacity_bytes) * 3 // 4
    except Exception:                      # e.g. interpret mode / no TPU info
        cap = 48 * 1024 * 1024             # safe on every generation
    want = int(working_bytes) + 8 * 1024 * 1024
    return int(max(16 * 1024 * 1024, min(want, cap)))


# ----------------------------------------------------------------------------
# Path A: small image, large batch -> one MXU matmul with blur^32 operator.
# ----------------------------------------------------------------------------
@functools.lru_cache(maxsize=8)
def _blur_power_matrix_T(w_key, h, w, n_iters):
    """(blur^n_iters).T as an f32 (HW, HW) array; blur = replication-padded 3x3 conv."""
    w33 = np.asarray(w_key, dtype=np.float64).reshape(3, 3)
    hw = h * w
    a = np.zeros((hw, hw), dtype=np.float64)
    for i in range(h):
        for j in range(w):
            p = i * w + j
            for ki in range(3):
                for kj in range(3):
                    wt = w33[ki, kj]
                    if wt == 0.0:
                        continue
                    ii = min(max(i + ki - 1, 0), h - 1)
                    jj = min(max(j + kj - 1, 0), w - 1)
                    a[p, ii * w + jj] += wt
    m = np.linalg.matrix_power(a, n_iters)
    return jnp.asarray(m.T, dtype=jnp.float32)


def _render_matmul_kernel(xf_ref, nf_ref, mt_ref, o_ref):
    # xf_ref: (tb, HW) flattened heightmaps   nf_ref: (tb, 3, HW) flattened normals
    # mt_ref: (HW, HW) = (blur^32).T          o_ref : (tb, HW) flattened render
    xf = xf_ref[...]
    # rx[b, p] = sum_q M[p, q] * x[b, q]  -- full-precision f32 MXU contraction.
    # (HIGHEST keeps the 1e-4 agreement with the iterative f32 recurrence.)
    rx = jnp.dot(xf, mt_ref[...],
                 preferred_element_type=jnp.float32,
                 precision=jax.lax.Precision.HIGHEST)
    ao = 1.0 - jnp.clip((rx - xf) * AO_SCALE, 0.0, 1.0)
    n = nf_ref[...]
    d1 = (LIGHT_DIR[0] * n[:, 0, :] + LIGHT_DIR[1] * n[:, 1, :]
          + LIGHT_DIR[2] * n[:, 2, :])
    d1 = jnp.maximum(d1, 0.0)
    o_ref[...] = (d1 * 0.3 + 0.7) * ao


def _forward_matmul(x, normals, w33):
    b, _, h, w = x.shape
    hw = h * w
    mt = _blur_power_matrix_T(
        tuple(np.asarray(w33, np.float64).reshape(-1).tolist()), h, w, N_BLUR_ITERS)
    # Spatially flattened => lane-dense last dim (HW) and unmasked stores.
    xf = x.reshape(b, hw)
    nf = normals.reshape(b, 3, hw)
    tb = b if b <= _MATMUL_BATCH_TILE else _MATMUL_BATCH_TILE   # 32 % 8 == 0
    working = (2 * hw * hw + 2 * tb * hw + 2 * tb * 3 * hw + 2 * tb * hw) * 4
    out_f = pl.pallas_call(
        _render_matmul_kernel,
        out_shape=jax.ShapeDtypeStruct((b, hw), jnp.float32),
        grid=(pl.cdiv(b, tb),),
        in_specs=[
            pl.BlockSpec((tb, hw), lambda i: (i, 0)),
            pl.BlockSpec((tb, 3, hw), lambda i: (i, 0, 0)),
            pl.BlockSpec((hw, hw), lambda i: (0, 0)),   # operator stays resident
        ],
        out_specs=pl.BlockSpec((tb, hw), lambda i: (i, 0)),
        compiler_params=pltpu.CompilerParams(
            dimension_semantics=("parallel",),
            vmem_limit_bytes=_vmem_limit_bytes(working)),
    )(xf, nf, mt)
    return out_f.reshape(b, 1, h, w)


# ----------------------------------------------------------------------------
# Path B: general stencil kernel (one lane-packed sample resident per step).
# ----------------------------------------------------------------------------
def _make_stencil_kernel(w33, sample_w):
    # Constant-fold the fixed 3x3 filter and group taps by weight: the module's
    # cross filter becomes 0.25*(up+down+left+right) (1 mul + 3 adds / iter).
    groups = defaultdict(list)
    for ki in range(3):
        for kj in range(3):
            wt = float(w33[ki, kj])
            if wt != 0.0:
                groups[wt].append((ki - 1, kj - 1))
    groups = [(wt, tuple(offs)) for wt, offs in groups.items()]

    def kernel(x_ref, n_ref, o_ref):
        # x_ref: (1, 1, H, PW)   n_ref: (1, 3, H, PW)   o_ref: (1, 1, H, PW)
        x = x_ref[0, 0]                                   # (H, PW) f32
        hh, pw = x.shape

        # Edge masks built ONCE (hoisted) and closed over by the blur loop.
        # col % sample_w gives per-packed-sample columns, so the replication
        # boundary is honored at lane-pack seams as well as the global edges.
        row = lax.broadcasted_iota(jnp.int32, (hh, pw), 0)
        col = lax.broadcasted_iota(jnp.int32, (hh, pw), 1)
        col_s = col % sample_w
        at_top = row == 0
        at_bot = row == hh - 1
        at_left = col_s == 0
        at_right = col_s == sample_w - 1

        def shift_rows(a, di):
            # a[clamp(i+di), :] (replication): sublane roll (XLU) + 1 VPU select,
            # using non-negative shifts only (roll by 1 / hh-1).
            if di == -1:
                return jnp.where(at_top, a, pltpu.roll(a, 1, 0))
            return jnp.where(at_bot, a, pltpu.roll(a, hh - 1, 0))

        def shift_cols(a, dj):
            # a[:, clamp(j+dj)] within each packed sample: lane roll (XLU) + 1
            # VPU select; co-issues with the adds instead of burning vld/vst.
            if dj == -1:
                return jnp.where(at_left, a, pltpu.roll(a, 1, 1))
            return jnp.where(at_right, a, pltpu.roll(a, pw - 1, 1))

        def tap(a, di, dj):
            if di != 0:
                a = shift_rows(a, di)
            if dj != 0:
                a = shift_cols(a, dj)
            return a

        def tree_sum(parts):
            while len(parts) > 1:
                nxt = [parts[i] + parts[i + 1] for i in range(0, len(parts) - 1, 2)]
                if len(parts) % 2:
                    nxt.append(parts[-1])
                parts = nxt
            return parts[0]

        def blur_once(rx):
            parts = []
            for wt, offs in groups:
                s = tree_sum([tap(rx, di, dj) for (di, dj) in offs])
                parts.append(wt * s)       # one multiply per distinct weight
            if not parts:
                return jnp.zeros_like(rx)
            return tree_sum(parts)

        def body(_, rx):
            for _u in range(_BLUR_UNROLL):   # manual 4x unroll: LLO visibility
                rx = blur_once(rx)
            return rx

        rx = lax.fori_loop(0, N_BLUR_ITERS // _BLUR_UNROLL, body, x)

        ao = 1.0 - jnp.clip((rx - x) * AO_SCALE, 0.0, 1.0)
        d1 = (LIGHT_DIR[0] * n_ref[0, 0] + LIGHT_DIR[1] * n_ref[0, 1]
              + LIGHT_DIR[2] * n_ref[0, 2])
        d1 = jnp.maximum(d1, 0.0)
        o_ref[0, 0] = (d1 * 0.3 + 0.7) * ao

    return kernel


def _pack_factor(b, w):
    """Largest divisor of b such that packed width p*w stays <= 128 lanes."""
    cap = max(1, 128 // w)
    p = 1
    for d in range(1, min(b, cap) + 1):
        if b % d == 0:
            p = d
    return p


def _forward_stencil(x, normals, w33):
    b, _, h, w = x.shape
    p = _pack_factor(b, w)
    g = b // p
    pw = p * w
    if p > 1:
        # Lane-dense packing: p samples side-by-side along the lane axis so
        # vregs and output stores are filled when W < 128 (per-sample edge
        # masks in the kernel keep replication semantics at the seams).
        xp = x.reshape(g, p, h, w).transpose(0, 2, 1, 3).reshape(g, 1, h, pw)
        npk = normals.reshape(g, p, 3, h, w).transpose(0, 2, 3, 1, 4).reshape(g, 3, h, pw)
    else:
        xp, npk = x, normals

    # Working set: double-buffered x/normals/out blocks + loop temporaries.
    working = (2 * (1 + 3 + 1) + 12) * h * pw * 4
    # TODO(synk): for very large images (block bytes approaching the VMEM cap)
    # add H-tiling with a 32-row halo (the 32-iteration cross blur has a +/-32
    # receptive field) and single-buffer the normals (epilogue-only read).
    out_p = pl.pallas_call(
        _make_stencil_kernel(w33, w),
        out_shape=jax.ShapeDtypeStruct((g, 1, h, pw), jnp.float32),
        grid=(g,),
        in_specs=[
            pl.BlockSpec((1, 1, h, pw), lambda i: (i, 0, 0, 0)),   # heightmap
            pl.BlockSpec((1, 3, h, pw), lambda i: (i, 0, 0, 0)),   # normals
        ],
        out_specs=pl.BlockSpec((1, 1, h, pw), lambda i: (i, 0, 0, 0)),
        compiler_params=pltpu.CompilerParams(
            dimension_semantics=("parallel",),     # two TCs split the batch grid
            vmem_limit_bytes=_vmem_limit_bytes(working)),
    )(xp, npk)

    if p > 1:
        out = out_p.reshape(g, h, p, w).transpose(0, 2, 1, 3).reshape(b, 1, h, w)
    else:
        out = out_p
    return out


# ----------------------------------------------------------------------------
# Public wrapper + pure-JAX reference.
# ----------------------------------------------------------------------------
def heightmap_rendering_loss_forward(x, normals, base_wts=None):
    """Pallas implementation of HeightmapRenderingLoss.forward(x, normals)."""
    if base_wts is None:
        base_wts = _default_blur_filter()
    w33 = np.asarray(jax.device_get(base_wts), dtype=np.float64).reshape(3, 3)
    if x.shape[1] != 1:
        x = x[:, 0:1, :, :]
    x = x.astype(jnp.float32)
    normals = normals.astype(jnp.float32)
    b, _, h, w = x.shape
    assert normals.shape == (b, 3, h, w), normals.shape
    # Matmul path only when the batch is large enough to fill the MXU M dim and
    # amortize the (HW,HW) operator DMA; otherwise the stencil path wins.
    if h * w <= _MATMUL_MAX_PIXELS and b >= _MATMUL_MIN_BATCH:
        return _forward_matmul(x, normals, w33)
    return _forward_stencil(x, normals, w33)


def _reference(x, normals, base_wts):
    """Pure-JAX reference of the same forward pass (for verification)."""
    base_wts = jnp.asarray(base_wts, jnp.float32).reshape(3, 3)
    if x.shape[1] != 1:
        x = x[:, 0:1, :, :]
    x = x.astype(jnp.float32)
    h, w = x.shape[2], x.shape[3]
    rx = x
    for _ in range(N_BLUR_ITERS):
        p = jnp.pad(rx, ((0, 0), (0, 0), (1, 1), (1, 1)), mode="edge")
        acc = jnp.zeros_like(rx)
        for ki in range(3):
            for kj in range(3):
                acc = acc + base_wts[ki, kj] * p[:, :, ki:ki + h, kj:kj + w]
        rx = acc
    ao = 1.0 - jnp.clip((rx - x) * AO_SCALE, 0.0, 1.0)
    d1 = (LIGHT_DIR[0] * normals[:, 0:1] + LIGHT_DIR[1] * normals[:, 1:2]
          + LIGHT_DIR[2] * normals[:, 2:3])
    d1 = jnp.maximum(d1, 0.0)
    return (d1 * 0.3 + 0.7) * ao


if __name__ == "__main__":
    key = jax.random.PRNGKey(0)
    kx, kn, kx2, kn2, kx3, kn3 = jax.random.split(key, 6)

    c = 1.0 / 4.0
    base_wts = jnp.array([[0.0, c, 0.0], [c, 0.0, c], [0.0, c, 0.0]], dtype=jnp.float32)

    # --- spec shapes (B, C, H, W) = (2, 4, 16, 16): stencil path, 2-way lane packing.
    B, C, H, W = 2, 4, 16, 16
    x = jax.random.uniform(kx, (B, C, H, W), dtype=jnp.float32)
    normals = jax.random.normal(kn, (B, 3, H, W), dtype=jnp.float32)
    normals = normals / jnp.sqrt(jnp.sum(normals * normals, axis=1, keepdims=True) + 1e-8)
    out = jax.block_until_ready(heightmap_rendering_loss_forward(x, normals, base_wts))
    assert out.shape == (B, 1, H, W)
    ref = _reference(x, normals, base_wts)
    np.testing.assert_allclose(np.asarray(out), np.asarray(ref), rtol=1e-4, atol=1e-5)

    # --- wide image (W=128): stencil path, no packing, batch grid over both cores.
    B2, H2, W2 = 2, 16, 128
    x2 = jax.random.uniform(kx2, (B2, 1, H2, W2), dtype=jnp.float32)
    n2 = jax.random.normal(kn2, (B2, 3, H2, W2), dtype=jnp.float32)
    n2 = n2 / jnp.sqrt(jnp.sum(n2 * n2, axis=1, keepdims=True) + 1e-8)
    out2 = jax.block_until_ready(heightmap_rendering_loss_forward(x2, n2, base_wts))
    assert out2.shape == (B2, 1, H2, W2)
    ref2 = _reference(x2, n2, base_wts)
    np.testing.assert_allclose(np.asarray(out2), np.asarray(ref2), rtol=1e-4, atol=1e-5)

    # --- larger batch, small image: MXU matmul path with the blur^32 operator.
    B3, H3, W3 = 8, 16, 16
    x3 = jax.random.uniform(kx3, (B3, 1, H3, W3), dtype=jnp.float32)
    n3 = jax.random.normal(kn3, (B3, 3, H3, W3), dtype=jnp.float32)
    n3 = n3 / jnp.sqrt(jnp.sum(n3 * n3, axis=1, keepdims=True) + 1e-8)
    out3 = jax.block_until_ready(heightmap_rendering_loss_forward(x3, n3, base_wts))
    assert out3.shape == (B3, 1, H3, W3)
    ref3 = _reference(x3, n3, base_wts)
    np.testing.assert_allclose(np.asarray(out3), np.asarray(ref3), rtol=1e-4, atol=1e-4)

    print("KERNEL_OK")
</pallas_src>

<mosaic_0001>
module attributes {stable_mosaic.version = 11 : i64} {
  func.func @kernel(%arg0: i32, %arg1: memref<1x1x16x32xf32, #tpu.memory_space<vmem>>, %arg2: memref<1x3x16x32xf32, #tpu.memory_space<vmem>>, %arg3: memref<1x1x16x32xf32, #tpu.memory_space<vmem>>) attributes {dimension_semantics = [#tpu.dimension_semantics<parallel>], iteration_bounds = array<i64: 1>, scalar_prefetch = 0 : i64, scratch_operands = 0 : i64, tpu.core_type = #tpu.core_type<tc>, window_params = [{transform_indices = @transform_0, window_bounds = array<i64: 1, 1, 16, 32>}, {transform_indices = @transform_1, window_bounds = array<i64: 1, 3, 16, 32>}, {transform_indices = @transform_2, window_bounds = array<i64: 1, 1, 16, 32>}]} {
    %c0 = arith.constant 0 : index
    %c0_0 = arith.constant 0 : index
    %c0_1 = arith.constant 0 : index
    %c0_2 = arith.constant 0 : index
    %0 = vector.load %arg1[%c0, %c0_0, %c0_1, %c0_2] : memref<1x1x16x32xf32, #tpu.memory_space<vmem>>, vector<1x1x16x32xf32>
    %1 = vector.shape_cast %0 : vector<1x1x16x32xf32> to vector<16x32xf32>
    %2 = tpu.iota {dimensions = array<i32: 0>} : vector<16x32xi32>
    %3 = tpu.iota {dimensions = array<i32: 1>} : vector<16x32xi32>
    %c16_i32 = arith.constant 16 : i32
    %c0_i32 = arith.constant 0 : i32
    %4 = arith.cmpi eq, %c16_i32, %c0_i32 : i32
    %c1_i32 = arith.constant 1 : i32
    %5 = arith.select %4, %c1_i32, %c16_i32 : i32
    %6 = vector.broadcast %5 : i32 to vector<16x32xi32>
    %7 = arith.remsi %3, %6 : vector<16x32xi32>
    %c0_i32_3 = arith.constant 0 : i32
    %8 = vector.broadcast %c0_i32_3 : i32 to vector<16x32xi32>
    %9 = arith.cmpi ne, %7, %8 : vector<16x32xi32>
    %c0_i32_4 = arith.constant 0 : i32
    %10 = vector.broadcast %c0_i32_4 : i32 to vector<16x32xi32>
    %11 = arith.cmpi slt, %7, %10 : vector<16x32xi32>
    %c0_i32_5 = arith.constant 0 : i32
    %12 = arith.cmpi slt, %5, %c0_i32_5 : i32
    %13 = vector.broadcast %12 : i1 to vector<16x32xi1>
    %14 = vector.broadcast %13 : vector<16x32xi1> to vector<16x32xi1>
    %15 = arith.xori %11, %14 : vector<16x32xi1>
    %16 = arith.andi %15, %9 : vector<16x32xi1>
    %17 = vector.broadcast %5 : i32 to vector<16x32xi32>
    %18 = arith.addi %7, %17 : vector<16x32xi32>
    %19 = arith.select %16, %18, %7 : vector<16x32xi1>, vector<16x32xi32>
    %c0_i32_6 = arith.constant 0 : i32
    %20 = vector.broadcast %c0_i32_6 : i32 to vector<16x32xi32>
    %21 = arith.cmpi eq, %2, %20 : vector<16x32xi32>
    %c15_i32 = arith.constant 15 : i32
    %22 = vector.broadcast %c15_i32 : i32 to vector<16x32xi32>
    %23 = arith.cmpi eq, %2, %22 : vector<16x32xi32>
    %c0_i32_7 = arith.constant 0 : i32
    %24 = vector.broadcast %c0_i32_7 : i32 to vector<16x32xi32>
    %25 = arith.cmpi eq, %19, %24 : vector<16x32xi32>
    %c15_i32_8 = arith.constant 15 : i32
    %26 = vector.broadcast %c15_i32_8 : i32 to vector<16x32xi32>
    %27 = arith.cmpi eq, %19, %26 : vector<16x32xi32>
    %c0_i32_9 = arith.constant 0 : i32
    %c8_i32 = arith.constant 8 : i32
    %28 = arith.addi %c0_i32_9, %c8_i32 : i32
    %c1_i32_10 = arith.constant 1 : i32
    %29 = scf.for %arg4 = %c0_i32_9 to %28 step %c1_i32_10 iter_args(%arg5 = %1) -> (vector<16x32xf32>)  : i32 {
      %c1_i32_34 = arith.constant 1 : i32
      %63 = tpu.dynamic_rotate %arg5 by %c1_i32_34 dim 0 : vector<16x32xf32>, i32 -> vector<16x32xf32>
      %64 = arith.select %21, %arg5, %63 : vector<16x32xi1>, vector<16x32xf32>
      %c1_i32_35 = arith.constant 1 : i32
      %65 = tpu.dynamic_rotate %arg5 by %c1_i32_35 dim 1 : vector<16x32xf32>, i32 -> vector<16x32xf32>
      %66 = arith.select %25, %arg5, %65 : vector<16x32xi1>, vector<16x32xf32>
      %c31_i32 = arith.constant 31 : i32
      %67 = tpu.dynamic_rotate %arg5 by %c31_i32 dim 1 : vector<16x32xf32>, i32 -> vector<16x32xf32>
      %68 = arith.select %27, %arg5, %67 : vector<16x32xi1>, vector<16x32xf32>
      %c15_i32_36 = arith.constant 15 : i32
      %69 = tpu.dynamic_rotate %arg5 by %c15_i32_36 dim 0 : vector<16x32xf32>, i32 -> vector<16x32xf32>
      %70 = arith.select %23, %arg5, %69 : vector<16x32xi1>, vector<16x32xf32>
      %71 = arith.addf %64, %66 : vector<16x32xf32>
      %72 = arith.addf %68, %70 : vector<16x32xf32>
      %73 = arith.addf %71, %72 : vector<16x32xf32>
      %cst_37 = arith.constant 2.500000e-01 : f32
      %74 = vector.broadcast %cst_37 : f32 to vector<16x32xf32>
      %75 = arith.mulf %74, %73 : vector<16x32xf32>
      %c1_i32_38 = arith.constant 1 : i32
      %76 = tpu.dynamic_rotate %75 by %c1_i32_38 dim 0 : vector<16x32xf32>, i32 -> vector<16x32xf32>
      %77 = arith.select %21, %75, %76 : vector<16x32xi1>, vector<16x32xf32>
      %c1_i32_39 = arith.constant 1 : i32
      %78 = tpu.dynamic_rotate %75 by %c1_i32_39 dim 1 : vector<16x32xf32>, i32 -> vector<16x32xf32>
      %79 = arith.select %25, %75, %78 : vector<16x32xi1>, vector<16x32xf32>
      %c31_i32_40 = arith.constant 31 : i32
      %80 = tpu.dynamic_rotate %75 by %c31_i32_40 dim 1 : vector<16x32xf32>, i32 -> vector<16x32xf32>
      %81 = arith.select %27, %75, %80 : vector<16x32xi1>, vector<16x32xf32>
      %c15_i32_41 = arith.constant 15 : i32
      %82 = tpu.dynamic_rotate %75 by %c15_i32_41 dim 0 : vector<16x32xf32>, i32 -> vector<16x32xf32>
      %83 = arith.select %23, %75, %82 : vector<16x32xi1>, vector<16x32xf32>
      %84 = arith.addf %77, %79 : vector<16x32xf32>
      %85 = arith.addf %81, %83 : vector<16x32xf32>
      %86 = arith.addf %84, %85 : vector<16x32xf32>
      %cst_42 = arith.constant 2.500000e-01 : f32
      %87 = vector.broadcast %cst_42 : f32 to vector<16x32xf32>
      %88 = arith.mulf %87, %86 : vector<16x32xf32>
      %c1_i32_43 = arith.constant 1 : i32
      %89 = tpu.dynamic_rotate %88 by %c1_i32_43 dim 0 : vector<16x32xf32>, i32 -> vector<16x32xf32>
      %90 = arith.select %21, %88, %89 : vector<16x32xi1>, vector<16x32xf32>
      %c1_i32_44 = arith.constant 1 : i32
      %91 = tpu.dynamic_rotate %88 by %c1_i32_44 dim 1 : vector<16x32xf32>, i32 -> vector<16x32xf32>
      %92 = arith.select %25, %88, %91 : vector<16x32xi1>, vector<16x32xf32>
      %c31_i32_45 = arith.constant 31 : i32
      %93 = tpu.dynamic_rotate %88 by %c31_i32_45 dim 1 : vector<16x32xf32>, i32 -> vector<16x32xf32>
      %94 = arith.select %27, %88, %93 : vector<16x32xi1>, vector<16x32xf32>
      %c15_i32_46 = arith.constant 15 : i32
      %95 = tpu.dynamic_rotate %88 by %c15_i32_46 dim 0 : vector<16x32xf32>, i32 -> vector<16x32xf32>
      %96 = arith.select %23, %88, %95 : vector<16x32xi1>, vector<16x32xf32>
      %97 = arith.addf %90, %92 : vector<16x32xf32>
      %98 = arith.addf %94, %96 : vector<16x32xf32>
      %99 = arith.addf %97, %98 : vector<16x32xf32>
      %cst_47 = arith.constant 2.500000e-01 : f32
      %100 = vector.broadcast %cst_47 : f32 to vector<16x32xf32>
      %101 = arith.mulf %100, %99 : vector<16x32xf32>
      %c1_i32_48 = arith.constant 1 : i32
      %102 = tpu.dynamic_rotate %101 by %c1_i32_48 dim 0 : vector<16x32xf32>, i32 -> vector<16x32xf32>
      %103 = arith.select %21, %101, %102 : vector<16x32xi1>, vector<16x32xf32>
      %c1_i32_49 = arith.constant 1 : i32
      %104 = tpu.dynamic_rotate %101 by %c1_i32_49 dim 1 : vector<16x32xf32>, i32 -> vector<16x32xf32>
      %105 = arith.select %25, %101, %104 : vector<16x32xi1>, vector<16x32xf32>
      %c31_i32_50 = arith.constant 31 : i32
      %106 = tpu.dynamic_rotate %101 by %c31_i32_50 dim 1 : vector<16x32xf32>, i32 -> vector<16x32xf32>
      %107 = arith.select %27, %101, %106 : vector<16x32xi1>, vector<16x32xf32>
      %c15_i32_51 = arith.constant 15 : i32
      %108 = tpu.dynamic_rotate %101 by %c15_i32_51 dim 0 : vector<16x32xf32>, i32 -> vector<16x32xf32>
      %109 = arith.select %23, %101, %108 : vector<16x32xi1>, vector<16x32xf32>
      %110 = arith.addf %103, %105 : vector<16x32xf32>
      %111 = arith.addf %107, %109 : vector<16x32xf32>
      %112 = arith.addf %110, %111 : vector<16x32xf32>
      %cst_52 = arith.constant 2.500000e-01 : f32
      %113 = vector.broadcast %cst_52 : f32 to vector<16x32xf32>
      %114 = arith.mulf %113, %112 : vector<16x32xf32>
      scf.yield %114 : vector<16x32xf32>
    }
    %30 = arith.subf %29, %1 : vector<16x32xf32>
    %cst = arith.constant 4.000000e+00 : f32
    %31 = vector.broadcast %cst : f32 to vector<16x32xf32>
    %32 = arith.mulf %30, %31 : vector<16x32xf32>
    %cst_11 = arith.constant 0.000000e+00 : f32
    %cst_12 = arith.constant 1.000000e+00 : f32
    %33 = vector.broadcast %cst_11 : f32 to vector<16x32xf32>
    %34 = arith.maximumf %33, %32 : vector<16x32xf32>
    %35 = vector.broadcast %cst_12 : f32 to vector<16x32xf32>
    %36 = arith.minimumf %35, %34 : vector<16x32xf32>
    %cst_13 = arith.constant 1.000000e+00 : f32
    %37 = vector.broadcast %cst_13 : f32 to vector<16x32xf32>
    %38 = arith.subf %37, %36 : vector<16x32xf32>
    %c0_14 = arith.constant 0 : index
    %c0_15 = arith.constant 0 : index
    %c0_16 = arith.constant 0 : index
    %c0_17 = arith.constant 0 : index
    %39 = vector.load %arg2[%c0_14, %c0_15, %c0_16, %c0_17] : memref<1x3x16x32xf32, #tpu.memory_space<vmem>>, vector<1x1x16x32xf32>
    %40 = vector.shape_cast %39 : vector<1x1x16x32xf32> to vector<16x32xf32>
    %cst_18 = arith.constant 7.053000e-01 : f32
    %41 = vector.broadcast %cst_18 : f32 to vector<16x32xf32>
    %42 = arith.mulf %41, %40 : vector<16x32xf32>
    %c0_19 = arith.constant 0 : index
    %c1 = arith.constant 1 : index
    %c0_20 = arith.constant 0 : index
    %c0_21 = arith.constant 0 : index
    %43 = vector.load %arg2[%c0_19, %c1, %c0_20, %c0_21] : memref<1x3x16x32xf32, #tpu.memory_space<vmem>>, vector<1x1x16x32xf32>
    %44 = vector.shape_cast %43 : vector<1x1x16x32xf32> to vector<16x32xf32>
    %cst_22 = arith.constant -7.053000e-01 : f32
    %45 = vector.broadcast %cst_22 : f32 to vector<16x32xf32>
    %46 = arith.mulf %45, %44 : vector<16x32xf32>
    %47 = arith.addf %42, %46 : vector<16x32xf32>
    %c0_23 = arith.constant 0 : index
    %c2 = arith.constant 2 : index
    %c0_24 = arith.constant 0 : index
    %c0_25 = arith.constant 0 : index
    %48 = vector.load %arg2[%c0_23, %c2, %c0_24, %c0_25] : memref<1x3x16x32xf32, #tpu.memory_space<vmem>>, vector<1x1x16x32xf32>
    %49 = vector.shape_cast %48 : vector<1x1x16x32xf32> to vector<16x32xf32>
    %cst_26 = arith.constant 7.053000e-01 : f32
    %50 = vector.broadcast %cst_26 : f32 to vector<16x32xf32>
    %51 = arith.mulf %50, %49 : vector<16x32xf32>
    %52 = arith.addf %47, %51 : vector<16x32xf32>
    %cst_27 = arith.constant 0.000000e+00 : f32
    %53 = vector.broadcast %cst_27 : f32 to vector<16x32xf32>
    %54 = arith.maximumf %52, %53 : vector<16x32xf32>
    %cst_28 = arith.constant 3.000000e-01 : f32
    %55 = vector.broadcast %cst_28 : f32 to vector<16x32xf32>
    %56 = arith.mulf %54, %55 : vector<16x32xf32>
    %cst_29 = arith.constant 0.699999988 : f32
    %57 = vector.broadcast %cst_29 : f32 to vector<16x32xf32>
    %58 = arith.addf %56, %57 : vector<16x32xf32>
    %59 = arith.mulf %58, %38 : vector<16x32xf32>
    %c0_30 = arith.constant 0 : index
    %c0_31 = arith.constant 0 : index
    %c0_32 = arith.constant 0 : index
    %c0_33 = arith.constant 0 : index
    %60 = vector.load %arg3[%c0_30, %c0_31, %c0_32, %c0_33] : memref<1x1x16x32xf32, #tpu.memory_space<vmem>>, vector<1x1x16x32xf32>
    %61 = vector.shape_cast %60 : vector<1x1x16x32xf32> to vector<16x32xf32>
    %62 = vector.shape_cast %59 : vector<16x32xf32> to vector<1x1x16x32xf32>
    tpu.vector_store %arg3[%c0_30, %c0_31, %c0_32, %c0_33], %62 {strides = array<i32>} : memref<1x1x16x32xf32, #tpu.memory_space<vmem>>, vector<1x1x16x32xf32>,
    return
  }
  func.func @transform_0(%arg0: i32) -> (i32, i32, i32, i32) {
    %c0_i32 = arith.constant 0 : i32
    %c0_i32_0 = arith.constant 0 : i32
    %c0_i32_1 = arith.constant 0 : i32
    %c0_i32_2 = arith.constant 0 : i32
    return %arg0, %c0_i32, %c0_i32_0, %c0_i32_1 : i32, i32, i32, i32
  }
  func.func @transform_1(%arg0: i32) -> (i32, i32, i32, i32) {
    %c0_i32 = arith.constant 0 : i32
    %c0_i32_0 = arith.constant 0 : i32
    %c0_i32_1 = arith.constant 0 : i32
    %c0_i32_2 = arith.constant 0 : i32
    return %arg0, %c0_i32, %c0_i32_0, %c0_i32_1 : i32, i32, i32, i32
  }
  func.func @transform_2(%arg0: i32) -> (i32, i32, i32, i32) {
    %c0_i32 = arith.constant 0 : i32
    %c0_i32_0 = arith.constant 0 : i32
    %c0_i32_1 = arith.constant 0 : i32
    %c0_i32_2 = arith.constant 0 : i32
    return %arg0, %c0_i32, %c0_i32_0, %c0_i32_1 : i32, i32, i32, i32
  }
}

</mosaic_0001>

<llo_original>
// kernel: tpu_custom_call.1
$region0: #{tpu_custom_call.1}
  #allocation0 [shape = 'u32[]', space=smem, size = 0x4, offset = 0x4, fixed_abs, tag = 'smem constant byte address 0x4 - core index']
  #allocation1 [shape = 'u32[144,128]{1,0:T(1,128)}', space=vmem, size = 0x12000, scoped, tag = 'internal scratch']
  %s0 = inlined_call_operand.hbm [shape: f32[1,1,16,32], index: 0, kind: input, shape index: {}]
  %s1 = inlined_call_operand.hbm [shape: f32[1,3,16,32], index: 1, kind: input, shape index: {}]
  %s2 = inlined_call_operand.hbm [shape: f32[1,1,16,32], index: 2, kind: output, shape index: {}]
  %s3 = sld [smem:[#allocation0]]
  $region33: #{tpu_custom_call.1} parent=0
    _
  %s5 = ssub.s32 1, %s3
  %s6 = scalar_select 0, %s5, %s3
  $region1: #{tpu_custom_call.1} parent=0
    #allocation2 [shape = 'u8[8192]{0}', space=vmem, size = 0x2000, scoped, tag = 'input window, operand 0, single buffered']
    #allocation3 [shape = 's32[1]{0}', space=sflag, size = 0x4, scoped, tag = 'scoped memory for tpu_custom_call.1']
    #allocation4 [shape = 's32[1]{0}', space=sflag, size = 0x4, scoped, tag = 'scoped memory for tpu_custom_call.1']
    #allocation5 [shape = 'u8[24576]{0}', space=vmem, size = 0x6000, scoped, tag = 'input window, operand 1, single buffered']
    #allocation6 [shape = 's32[1]{0}', space=sflag, size = 0x4, scoped, tag = 'scoped memory for tpu_custom_call.1']
    #allocation7 [shape = 'u8[8192]{0}', space=vmem, size = 0x2000, scoped, tag = 'output window, operand 0, single buffered']
    %7 = vsyncpa [#allocation3], 0
    %8 = vsyncpa [#allocation6], 0
    %9 = vsyncpa [#allocation4], 0
    // Predicated region
    $region2: #{tpu_custom_call.1} parent=1 // pred_check
      _
    $region3: #{tpu_custom_call.1} parent=1 // pred_check_branch
      %11 = sbr.rel (0) target = $region5
    $region4: #{tpu_custom_call.1} parent=1 // pred_region
      %s13 = ssub.s32 256, 256
      %14 = vsyncadd [#allocation3], %s13
      %s15 = sshll.u32 [#allocation2], 4
      %s16 = int_to_ptr.vmem [resolvable:$true] %s15
      %21 = dma.hbm_to_vmem [thread:$0]  %s0, 256, %s16, [#allocation3], 128, 128, 8
    $region5: #{tpu_custom_call.1} parent=1 // pred_fallthru
      _
    // Predicated region
    $region6: #{tpu_custom_call.1} parent=1 // pred_check
      _
    $region7: #{tpu_custom_call.1} parent=1 // pred_check_branch
      %23 = sbr.rel (0) target = $region9
    $region8: #{tpu_custom_call.1} parent=1 // pred_region
      %s25 = ssub.s32 768, 768
      %26 = vsyncadd [#allocation6], %s25
      %s27 = sshll.u32 [#allocation5], 4
      %s28 = int_to_ptr.vmem [resolvable:$true] %s27
      %33 = dma.hbm_to_vmem [thread:$0]  %s1, 768, %s28, [#allocation6], 128, 128, 8
    $region9: #{tpu_custom_call.1} parent=1 // pred_fallthru
      _
    // Predicated region
    $region10: #{tpu_custom_call.1} parent=1 // pred_check
      _
    $region11: #{tpu_custom_call.1} parent=1 // pred_check_branch
      %35 = sbr.rel (0) target = $region13
    $region12: #{tpu_custom_call.1} parent=1 // pred_region
      %36 = dma.done [#allocation3], 256
    $region13: #{tpu_custom_call.1} parent=1 // pred_fallthru
      _
    // Predicated region
    $region14: #{tpu_custom_call.1} parent=1 // pred_check
      _
    $region15: #{tpu_custom_call.1} parent=1 // pred_check_branch
      %38 = sbr.rel (0) target = $region17
    $region16: #{tpu_custom_call.1} parent=1 // pred_region
      %39 = dma.done [#allocation6], 768
    $region17: #{tpu_custom_call.1} parent=1 // pred_fallthru
      _
    %v40 = vld [vmem:[#allocation2] sm:$0xff]
    %v41 = vld [vmem:[#allocation2 + $0x8] sm:$0xff]
    %v42 = vlaneseq
    %v43 = vshrl.u32 %v42, 7
    %v44 = vadd.s32 %v43, 8
    %v45 = vlaneseq
    %v46 = vand.u32 %v45, 127
    %vm47 = vcmp.lt.s32.totalorder %v46, 0
    %v48 = vsub.s32 0, %v46
    %v49 = vsel %vm47, %v48, %v46
    %v50 = vshrl.u32 %v49, 4
    %v51 = vand.u32 %v49, 15
    %v52 = vsub.s32 0, %v51
    %v53 = vsel %vm47, %v52, %v51
    %vm54 = vcmp.ne.s32.totalorder %v53, 0
    %vm55 = vcmp.lt.s32.totalorder %v53, 0
    %vm56 = vmand %vm55, %vm54
    %v57 = vadd.s32 %v53, 16
    %v58 = vsel %vm56, %v57, %v53
    %vm59 = vcmp.eq.s32.totalorder %v43, 0
    %vm60 = vcmp.eq.s32.totalorder %v44, 0
    %vm61 = vcmp.eq.s32.totalorder %v43, 15
    %vm62 = vcmp.eq.s32.totalorder %v44, 15
    %vm63 = vcmp.eq.s32.totalorder %v58, 0
    %vm64 = vcmp.eq.s32.totalorder %v58, 15
    loop: start=0, step=1, limit=8
    $region18: #{tpu_custom_call.1} parent=1 // loop_pre_header
      _
    $region19: #{tpu_custom_call.1} parent=1 // loop_header
      %s66 = sphi 0, %s70
      %p67 = scmp.ge.s32.totalorder %s66, 8
      %v71 = vphi %v40, %v274
      %v72 = vphi %v41, %v275
    $region20: #{tpu_custom_call.1} parent=1 // loop_header_branch
      %69 = sbr.rel (%p67) target = $region24
    $region21: #{tpu_custom_call.1} parent=1 // loop_body
      %v73 = vrot.slane %v71, 7
      %v74 = vrot.slane %v72, 7
      %vm75 = vcmp.lt.s32.totalorder %v43, 1
      %v76 = vsel %vm75, %v73, %v74
      %v77 = vsel %vm75, %v74, %v73
      %v78 = vsel %vm59, %v71, %v77
      %v79 = vsel %vm60, %v72, %v76
      %vm80 = vcmask 1047808
      %81 = vrot.lane.b32.xlu0 %v71, 32
      %v82 = vpop.permute.xlu0 %81
      %v83 = vsel %vm80, %v82, %v71
      %84 = vrot.lane.b32.xlu0 %v72, 32
      %v85 = vpop.permute.xlu0 %84
      %v86 = vsel %vm80, %v85, %v72
      %87 = vrot.lane.b32.xlu0 %v83, 32
      %v88 = vpop.permute.xlu0 %87
      %89 = vrot.lane.b32.xlu0 %v86, 32
      %v90 = vpop.permute.xlu0 %89
      %v91 = vsel %vm80, %v88, %v71
      %v92 = vsel %vm80, %v90, %v72
      %95 = vrot.lane.b32.xlu0 %v91, 97
      %v96 = vpop.permute.xlu0 %95
      %97 = vrot.lane.b32.xlu0 %v92, 97
      %v98 = vpop.permute.xlu0 %97
      %v101 = vsel %vm63, %v71, %v96
      %v102 = vsel %vm63, %v72, %v98
      %103 = vrot.lane.b32.xlu0 %v91, 127
      %v104 = vpop.permute.xlu0 %103
      %105 = vrot.lane.b32.xlu0 %v92, 127
      %v106 = vpop.permute.xlu0 %105
      %v109 = vsel %vm64, %v71, %v104
      %v110 = vsel %vm64, %v72, %v106
      %v111 = vrot.slane %v71, 1
      %v112 = vrot.slane %v72, 1
      %vm113 = vcmp.lt.s32.totalorder %v43, 7
      %v114 = vsel %vm113, %v111, %v112
      %v115 = vsel %vm113, %v112, %v111
      %v116 = vsel %vm61, %v71, %v114
      %v117 = vsel %vm62, %v72, %v115
      %v118 = vadd.f32 %v78, %v101
      %v119 = vadd.f32 %v79, %v102
      %v120 = vadd.f32 %v109, %v116
      %v121 = vadd.f32 %v110, %v117
      %v122 = vadd.f32 %v118, %v120
      %v123 = vadd.f32 %v119, %v121
      %v124 = vmul.f32 %v122, 0.25
      %v125 = vmul.f32 %v123, 0.25
      %v126 = vrot.slane %v124, 7
      %v127 = vrot.slane %v125, 7
      %v128 = vsel %vm75, %v126, %v127
      %v129 = vsel %vm75, %v127, %v126
      %v130 = vsel %vm59, %v124, %v129
      %v131 = vsel %vm60, %v125, %v128
      %132 = vrot.lane.b32.xlu0 %v124, 32
      %v133 = vpop.permute.xlu0 %132
      %v134 = vsel %vm80, %v133, %v124
      %135 = vrot.lane.b32.xlu0 %v125, 32
      %v136 = vpop.permute.xlu0 %135
      %v137 = vsel %vm80, %v136, %v125
      %138 = vrot.lane.b32.xlu0 %v134, 32
      %v139 = vpop.permute.xlu0 %138
      %140 = vrot.lane.b32.xlu0 %v137, 32
      %v141 = vpop.permute.xlu0 %140
      %v142 = vsel %vm80, %v139, %v124
      %v143 = vsel %vm80, %v141, %v125
      %146 = vrot.lane.b32.xlu0 %v142, 97
      %v147 = vpop.permute.xlu0 %146
      %148 = vrot.lane.b32.xlu0 %v143, 97
      %v149 = vpop.permute.xlu0 %148
      %v152 = vsel %vm63, %v124, %v147
      %v153 = vsel %vm63, %v125, %v149
      %154 = vrot.lane.b32.xlu0 %v142, 127
      %v155 = vpop.permute.xlu0 %154
      %156 = vrot.lane.b32.xlu0 %v143, 127
      %v157 = vpop.permute.xlu0 %156
      %v160 = vsel %vm64, %v124, %v155
      %v161 = vsel %vm64, %v125, %v157
      %v162 = vrot.slane %v124, 1
      %v163 = vrot.slane %v125, 1
      %v164 = vsel %vm113, %v162, %v163
      %v165 = vsel %vm113, %v163, %v162
      %v166 = vsel %vm61, %v124, %v164
      %v167 = vsel %vm62, %v125, %v165
      %v168 = vadd.f32 %v130, %v152
      %v169 = vadd.f32 %v131, %v153
      %v170 = vadd.f32 %v160, %v166
      %v171 = vadd.f32 %v161, %v167
      %v172 = vadd.f32 %v168, %v170
      %v173 = vadd.f32 %v169, %v171
      %v174 = vmul.f32 %v172, 0.25
      %v175 = vmul.f32 %v173, 0.25
      %v176 = vrot.slane %v174, 7
      %v177 = vrot.slane %v175, 7
      %v178 = vsel %vm75, %v176, %v177
      %v179 = vsel %vm75, %v177, %v176
      %v180 = vsel %vm59, %v174, %v179
      %v181 = vsel %vm60, %v175, %v178
      %182 = vrot.lane.b32.xlu0 %v174, 32
      %v183 = vpop.permute.xlu0 %182
      %v184 = vsel %vm80, %v183, %v174
      %185 = vrot.lane.b32.xlu0 %v175, 32
      %v186 = vpop.permute.xlu0 %185
      %v187 = vsel %vm80, %v186, %v175
      %188 = vrot.lane.b32.xlu0 %v184, 32
      %v189 = vpop.permute.xlu0 %188
      %190 = vrot.lane.b32.xlu0 %v187, 32
      %v191 = vpop.permute.xlu0 %190
      %v192 = vsel %vm80, %v189, %v174
      %v193 = vsel %vm80, %v191, %v175
      %196 = vrot.lane.b32.xlu0 %v192, 97
      %v197 = vpop.permute.xlu0 %196
      %198 = vrot.lane.b32.xlu0 %v193, 97
      %v199 = vpop.permute.xlu0 %198
      %v202 = vsel %vm63, %v174, %v197
      %v203 = vsel %vm63, %v175, %v199
      %204 = vrot.lane.b32.xlu0 %v192, 127
      %v205 = vpop.permute.xlu0 %204
      %206 = vrot.lane.b32.xlu0 %v193, 127
      %v207 = vpop.permute.xlu0 %206
      %v210 = vsel %vm64, %v174, %v205
      %v211 = vsel %vm64, %v175, %v207
      %v212 = vrot.slane %v174, 1
      %v213 = vrot.slane %v175, 1
      %v214 = vsel %vm113, %v212, %v213
      %v215 = vsel %vm113, %v213, %v212
      %v216 = vsel %vm61, %v174, %v214
      %v217 = vsel %vm62, %v175, %v215
      %v218 = vadd.f32 %v180, %v202
      %v219 = vadd.f32 %v181, %v203
      %v220 = vadd.f32 %v210, %v216
      %v221 = vadd.f32 %v211, %v217
      %v222 = vadd.f32 %v218, %v220
      %v223 = vadd.f32 %v219, %v221
      %v224 = vmul.f32 %v222, 0.25
      %v225 = vmul.f32 %v223, 0.25
      %v226 = vrot.slane %v224, 7
      %v227 = vrot.slane %v225, 7
      %v228 = vsel %vm75, %v226, %v227
      %v229 = vsel %vm75, %v227, %v226
      %v230 = vsel %vm59, %v224, %v229
      %v231 = vsel %vm60, %v225, %v228
      %232 = vrot.lane.b32.xlu0 %v224, 32
      %v233 = vpop.permute.xlu0 %232
      %v234 = vsel %vm80, %v233, %v224
      %235 = vrot.lane.b32.xlu0 %v225, 32
      %v236 = vpop.permute.xlu0 %235
      %v237 = vsel %vm80, %v236, %v225
      %238 = vrot.lane.b32.xlu0 %v234, 32
      %v239 = vpop.permute.xlu0 %238
      %240 = vrot.lane.b32.xlu0 %v237, 32
      %v241 = vpop.permute.xlu0 %240
      %v242 = vsel %vm80, %v239, %v224
      %v243 = vsel %vm80, %v241, %v225
      %246 = vrot.lane.b32.xlu0 %v242, 97
      %v247 = vpop.permute.xlu0 %246
      %248 = vrot.lane.b32.xlu0 %v243, 97
      %v249 = vpop.permute.xlu0 %248
      %v252 = vsel %vm63, %v224, %v247
      %v253 = vsel %vm63, %v225, %v249
      %254 = vrot.lane.b32.xlu0 %v242, 127
      %v255 = vpop.permute.xlu0 %254
      %256 = vrot.lane.b32.xlu0 %v243, 127
      %v257 = vpop.permute.xlu0 %256
      %v260 = vsel %vm64, %v224, %v255
      %v261 = vsel %vm64, %v225, %v257
      %v262 = vrot.slane %v224, 1
      %v263 = vrot.slane %v225, 1
      %v264 = vsel %vm113, %v262, %v263
      %v265 = vsel %vm113, %v263, %v262
      %v266 = vsel %vm61, %v224, %v264
      %v267 = vsel %vm62, %v225, %v265
      %v268 = vadd.f32 %v230, %v252
      %v269 = vadd.f32 %v231, %v253
      %v270 = vadd.f32 %v260, %v266
      %v271 = vadd.f32 %v261, %v267
      %v272 = vadd.f32 %v268, %v270
      %v273 = vadd.f32 %v269, %v271
      %v274 = vmul.f32 %v272, 0.25
      %v275 = vmul.f32 %v273, 0.25
    $region22: #{tpu_custom_call.1} parent=1 // loop_footer
      %s70 = sadd.s32 1, %s66
    $region23: #{tpu_custom_call.1} parent=1 // loop_footer_branch
      %65 = sbr.rel target = $region19
    $region24: #{tpu_custom_call.1} parent=1 // loop_exit
      _
    %v276 = vsub.f32 %v71, %v40
    %v277 = vsub.f32 %v72, %v41
    %v278 = vmul.f32 %v276, 4.0
    %v279 = vmul.f32 %v277, 4.0
    %v280 = vmax.f32 %v278, 0.0
    %v281 = vmax.f32 %v279, 0.0
    %v282 = vmin.f32 %v280, 1.0
    %v283 = vmin.f32 %v281, 1.0
    %v284 = vsub.f32 1.0, %v282
    %v285 = vsub.f32 1.0, %v283
    %v286 = vld [vmem:[#allocation5] sm:$0xff]
    %v287 = vld [vmem:[#allocation5 + $0x8] sm:$0xff]
    %v288 = vmul.f32 %v286, 0.7053
    %v289 = vmul.f32 %v287, 0.7053
    %s290 = scalar_lea.vmem [#allocation5], 16
    %v291 = vld [vmem:[%s290] sm:$0xff]
    %v292 = vld [vmem:[%s290 + $0x8] sm:$0xff]
    %v293 = vmul.f32 %v291, -0.7053
    %v294 = vmul.f32 %v292, -0.7053
    %v295 = vadd.f32 %v288, %v293
    %v296 = vadd.f32 %v289, %v294
    %s297 = scalar_lea.vmem [#allocation5], 32
    %v298 = vld [vmem:[%s297] sm:$0xff]
    %v299 = vld [vmem:[%s297 + $0x8] sm:$0xff]
    %v300 = vmul.f32 %v298, 0.7053
    %v301 = vmul.f32 %v299, 0.7053
    %v302 = vadd.f32 %v295, %v300
    %v303 = vadd.f32 %v296, %v301
    %v304 = vmax.f32 %v302, 0.0
    %v305 = vmax.f32 %v303, 0.0
    %v306 = vmul.f32 %v304, 0.3
    %v307 = vmul.f32 %v305, 0.3
    %v308 = vadd.f32 %v306, 0.7
    %v309 = vadd.f32 %v307, 0.7
    %v310 = vmul.f32 %v308, %v284
    %v311 = vmul.f32 %v309, %v285
    %vm312 = vcmask 261120
    %313 = vst.msk [vmem:[#allocation7] sm:$0xff] %vm312, %v310
    %314 = vst.msk [vmem:[#allocation7 + $0x8] sm:$0xff] %vm312, %v311
    // Predicated region
    $region25: #{tpu_custom_call.1} parent=1 // pred_check
      _
    $region26: #{tpu_custom_call.1} parent=1 // pred_check_branch
      %316 = sbr.rel (0) target = $region28
    $region27: #{tpu_custom_call.1} parent=1 // pred_region
      %s318 = ssub.s32 256, 256
      %319 = vsyncadd [#allocation4], %s318
      %s320 = sshll.u32 [#allocation7], 4
      %s321 = int_to_ptr.vmem [resolvable:$true] %s320
      %326 = dma.vmem_to_hbm [thread:$0]  %s321, 256, %s2, [#allocation4], 128, 128, 8
    $region28: #{tpu_custom_call.1} parent=1 // pred_fallthru
      _
    // Predicated region
    $region29: #{tpu_custom_call.1} parent=1 // pred_check
      _
    $region30: #{tpu_custom_call.1} parent=1 // pred_check_branch
      %328 = sbr.rel (0) target = $region32
    $region31: #{tpu_custom_call.1} parent=1 // pred_region
      %329 = dma.done [#allocation4], 256
    $region32: #{tpu_custom_call.1} parent=1 // pred_fallthru
      _
    %330 = vsyncpa [#allocation3], 1
    %331 = vsyncpa [#allocation6], 1
    %332 = vsyncpa [#allocation4], 1

</llo_original>
